<compile_context>
chip_gen: v5e
topology: v5e:2x2
jax: 0.10.0
libtpu: 0.0.40
codegen_flags: <defaults>
</compile_context>

<pallas_src>
import functools

import jax
import jax.numpy as jnp
from jax.experimental import pallas as pl
from jax.experimental.pallas import tpu as pltpu


def _nw_kernel(w_ref, q_ref, k_ref, v_ref, o_ref):
    # Scalar parameter lives in SMEM; fold -0.5 * w^2 once on the scalar path.
    w = w_ref[0]
    c = -0.5 * w * w

    q = q_ref[...]                        # (TB, K)
    k = k_ref[...]                        # (TB, K)
    v = v_ref[...]                        # (TB, K)

    diff = q - k
    s = c * (diff * diff)                 # (TB, K), always <= 0
    # exp(s) <= 1, so no row-max subtraction is needed for overflow safety.
    p = jnp.exp(s)                        # (TB, K)

    numer = jnp.sum(p * v, axis=1)        # (TB,)
    denom = jnp.sum(p, axis=1)            # (TB,)
    # Guard against a whole row underflowing (denom == 0 -> inf/NaN).
    denom = jnp.maximum(denom, jnp.float32(1e-30))
    res = numer / denom                   # exact divide on ~1 vreg: free

    # Lane-dense store: per-row results go on the lane (last) axis -> unmasked vst.
    o_ref[...] = res[None, :]             # (1, TB)


def _pick_tile(B, K, vmem_budget_bytes=16 << 20):
    """Largest 128-multiple row tile that fits the (conservative) VMEM budget,
    keeping >= 2 grid steps whenever B spans more than one 128-row tile so the
    parallel grid axis can shard across v7x's two TensorCores."""
    k_lanes = pl.cdiv(K, 128) * 128                   # lane-padded K in VMEM
    bytes_per_row = 3 * 2 * k_lanes * 4               # 3 inputs x 2 buffers, f32
    tb_vmem = max(128, (vmem_budget_bytes // bytes_per_row) // 128 * 128)
    tb = min(1024, tb_vmem)
    b_ceil = pl.cdiv(B, 128) * 128
    if b_ceil >= 256:                                  # allow >= 2 grid steps
        tb = min(tb, max(128, (b_ceil // 2) // 128 * 128))
    return min(tb, b_ceil)


@functools.partial(jax.jit, static_argnames=("tb",))
def nw_kernel_regression(w, query, keys, value, *, tb=None):
    """Pallas forward of NWKernelRegression.

    Args:
      w:     (1,) float32 parameter.
      query: (B, K) float32.
      keys:  (B, K) float32.
      value: (B, K) float32.
      tb:    optional rows-per-grid-step override (multiple of 128).
    Returns:
      (B,) float32 -- same as PyTorch's y_hat.squeeze().
    """
    B, K = query.shape
    if tb is None:
        tb = _pick_tile(B, K)

    n_steps = pl.cdiv(B, tb)
    b_out = n_steps * tb                               # lane-dense output width

    # Explicit scoped-VMEM limit: covers v5e's 16 MiB default at large tiles,
    # stays well under v7x's 64 MiB physical VMEM for the tile sizes we pick.
    k_lanes = pl.cdiv(K, 128) * 128
    vmem_needed = 3 * 2 * tb * k_lanes * 4 + 2 * 8 * tb * 4
    vmem_limit = int(min(max(32 << 20, int(vmem_needed * 1.5)), 56 << 20))

    cost = pl.CostEstimate(
        flops=5 * B * K,
        transcendentals=B * K,
        bytes_accessed=12 * B * K + 4 * B,
    )

    out = pl.pallas_call(
        _nw_kernel,
        out_shape=jax.ShapeDtypeStruct((1, b_out), jnp.float32),
        grid=(n_steps,),
        in_specs=[
            pl.BlockSpec(memory_space=pltpu.SMEM),          # scalar param w
            pl.BlockSpec((tb, K), lambda i: (i, 0)),         # query tile
            pl.BlockSpec((tb, K), lambda i: (i, 0)),         # keys tile
            pl.BlockSpec((tb, K), lambda i: (i, 0)),         # value tile
        ],
        out_specs=pl.BlockSpec((1, tb), lambda i: (0, i)),   # lane-dense output
        compiler_params=pltpu.CompilerParams(
            dimension_semantics=("parallel",),               # megacore shard B
            vmem_limit_bytes=vmem_limit,
        ),
        cost_estimate=cost,
    )(w, query, keys, value)
    # Rows >= B of the padded output tail are garbage from partial last-block
    # reads; slice them off (never reduce over the padded region).
    return out[0, :B]


def _reference(w, query, keys, value):
    s = -0.5 * jnp.square(w * (query - keys))
    attn = jax.nn.softmax(s, axis=1)
    return jnp.sum(attn * value, axis=1)


if __name__ == "__main__":
    key = jax.random.PRNGKey(0)
    k_w, k_q, k_k, k_v = jax.random.split(key, 4)

    # Shapes from the d2l Nadaraya-Watson example: 50 queries, 49 key/value pairs.
    B, K = 50, 49

    # Deterministic parameter init (module __init__: torch.randn((1,))).
    w = jax.random.normal(k_w, (1,), dtype=jnp.float32)
    query = jax.random.normal(k_q, (B, K), dtype=jnp.float32)
    keys = jax.random.normal(k_k, (B, K), dtype=jnp.float32)
    value = jax.random.normal(k_v, (B, K), dtype=jnp.float32)

    y_hat = nw_kernel_regression(w, query, keys, value)
    jax.block_until_ready(y_hat)
    y_ref = _reference(w, query, keys, value)
    assert y_hat.shape == (B,)
    assert jnp.allclose(y_hat, y_ref, atol=1e-4, rtol=1e-4), float(
        jnp.max(jnp.abs(y_hat - y_ref))
    )

    # Second check: multi-step grid + partial last block (no wrapper padding).
    B2 = 200
    k_q2, k_k2, k_v2 = jax.random.split(k_q, 3)
    q2 = jax.random.normal(k_q2, (B2, K), dtype=jnp.float32)
    k2 = jax.random.normal(k_k2, (B2, K), dtype=jnp.float32)
    v2 = jax.random.normal(k_v2, (B2, K), dtype=jnp.float32)
    y2 = nw_kernel_regression(w, q2, k2, v2)
    jax.block_until_ready(y2)
    assert y2.shape == (B2,)
    assert jnp.allclose(y2, _reference(w, q2, k2, v2), atol=1e-4, rtol=1e-4)

    print("KERNEL_OK")
</pallas_src>

<mosaic_0001>
module attributes {stable_mosaic.version = 11 : i64} {
  func.func @_nw_kernel(%arg0: i32, %arg1: memref<1xf32, #tpu.memory_space<smem>>, %arg2: memref<128x49xf32, #tpu.memory_space<vmem>>, %arg3: memref<128x49xf32, #tpu.memory_space<vmem>>, %arg4: memref<128x49xf32, #tpu.memory_space<vmem>>, %arg5: memref<1x128xf32, #tpu.memory_space<vmem>>) attributes {dimension_semantics = [#tpu.dimension_semantics<parallel>], iteration_bounds = array<i64: 1>, scalar_prefetch = 0 : i64, scratch_operands = 0 : i64, tpu.core_type = #tpu.core_type<tc>, window_params = [{transform_indices = @transform_0, window_bounds = array<i64: 1>}, {transform_indices = @transform_1, window_bounds = array<i64: 128, 49>}, {transform_indices = @transform_2, window_bounds = array<i64: 128, 49>}, {transform_indices = @transform_3, window_bounds = array<i64: 128, 49>}, {transform_indices = @transform_4, window_bounds = array<i64: 1, 128>}]} {
    %c0 = arith.constant 0 : index
    %0 = memref.load %arg1[%c0] : memref<1xf32, #tpu.memory_space<smem>>
    %cst = arith.constant -5.000000e-01 : f32
    %1 = arith.mulf %cst, %0 : f32
    %2 = arith.mulf %1, %0 : f32
    %c0_0 = arith.constant 0 : index
    %c0_1 = arith.constant 0 : index
    %3 = vector.load %arg2[%c0_0, %c0_1] : memref<128x49xf32, #tpu.memory_space<vmem>>, vector<128x49xf32>
    %c0_2 = arith.constant 0 : index
    %c0_3 = arith.constant 0 : index
    %4 = vector.load %arg3[%c0_2, %c0_3] : memref<128x49xf32, #tpu.memory_space<vmem>>, vector<128x49xf32>
    %c0_4 = arith.constant 0 : index
    %c0_5 = arith.constant 0 : index
    %5 = vector.load %arg4[%c0_4, %c0_5] : memref<128x49xf32, #tpu.memory_space<vmem>>, vector<128x49xf32>
    %6 = arith.subf %3, %4 : vector<128x49xf32>
    %7 = arith.mulf %6, %6 : vector<128x49xf32>
    %8 = vector.broadcast %2 : f32 to vector<128x49xf32>
    %9 = arith.mulf %8, %7 : vector<128x49xf32>
    %10 = math.exp %9 : vector<128x49xf32>
    %11 = arith.mulf %10, %5 : vector<128x49xf32>
    %cst_6 = arith.constant dense<0.000000e+00> : vector<128xf32>
    %12 = vector.multi_reduction <add>, %11, %cst_6 [1] : vector<128x49xf32> to vector<128xf32>
    %cst_7 = arith.constant dense<0.000000e+00> : vector<128xf32>
    %13 = vector.multi_reduction <add>, %10, %cst_7 [1] : vector<128x49xf32> to vector<128xf32>
    %cst_8 = arith.constant 1.000000e-30 : f32
    %14 = vector.broadcast %cst_8 : f32 to vector<128xf32>
    %15 = arith.maximumf %13, %14 : vector<128xf32>
    %16 = arith.divf %12, %15 : vector<128xf32>
    %17 = vector.shape_cast %16 : vector<128xf32> to vector<1x128xf32>
    %c0_9 = arith.constant 0 : index
    %c0_10 = arith.constant 0 : index
    %18 = vector.load %arg5[%c0_9, %c0_10] : memref<1x128xf32, #tpu.memory_space<vmem>>, vector<1x128xf32>
    tpu.vector_store %arg5[%c0_9, %c0_10], %17 {strides = array<i32>} : memref<1x128xf32, #tpu.memory_space<vmem>>, vector<1x128xf32>,
    return
  }
  func.func @transform_0(%arg0: i32) -> i32 {
    %c0_i32 = arith.constant 0 : i32
    %c0_i32_0 = arith.constant 0 : i32
    return %c0_i32 : i32
  }
  func.func @transform_1(%arg0: i32) -> (i32, i32) {
    %c0_i32 = arith.constant 0 : i32
    %c0_i32_0 = arith.constant 0 : i32
    return %arg0, %c0_i32 : i32, i32
  }
  func.func @transform_2(%arg0: i32) -> (i32, i32) {
    %c0_i32 = arith.constant 0 : i32
    %c0_i32_0 = arith.constant 0 : i32
    return %arg0, %c0_i32 : i32, i32
  }
  func.func @transform_3(%arg0: i32) -> (i32, i32) {
    %c0_i32 = arith.constant 0 : i32
    %c0_i32_0 = arith.constant 0 : i32
    return %arg0, %c0_i32 : i32, i32
  }
  func.func @transform_4(%arg0: i32) -> (i32, i32) {
    %c0_i32 = arith.constant 0 : i32
    %c0_i32_0 = arith.constant 0 : i32
    return %c0_i32, %arg0 : i32, i32
  }
}

</mosaic_0001>

<llo_original>
// kernel: nw_kernel_regression.1
$region0: #{nw_kernel_regression.1}
  #allocation0 [shape = 'u32[]', space=smem, size = 0x4, offset = 0x4, fixed_abs, tag = 'smem constant byte address 0x4 - core index']
  #allocation1 [shape = 'u32[72,128]{1,0:T(1,128)}', space=vmem, size = 0x9000, scoped, tag = 'internal scratch']
  #allocation2 [shape = 'f32[1]{0:T(128)S(6)}', space=smem, size = 0x200, scoped, tag = 'scoped memory for nw_kernel_regression.1']
  %s0 = inlined_call_operand.<no memory space> [shape: f32[1], index: 0, kind: input, shape index: {}]
  %s1 = inlined_call_operand.hbm [shape: f32[50,49], index: 1, kind: input, shape index: {}]
  %s2 = inlined_call_operand.hbm [shape: f32[50,49], index: 2, kind: input, shape index: {}]
  %s3 = inlined_call_operand.hbm [shape: f32[50,49], index: 3, kind: input, shape index: {}]
  %s4 = inlined_call_operand.vmem [shape: f32[1,128], index: 4, kind: output, shape index: {}]
  %s5 = sld [smem:[#allocation0]]
  $region38: #{nw_kernel_regression.1} parent=0
    _
  %s7 = ssub.s32 1, %s5
  %s8 = scalar_select 0, %s7, %s5
  %9 = sst [smem:[#allocation2]] %s0
  $region1: #{nw_kernel_regression.1} parent=0
    #allocation3 [shape = 'u8[65536]{0}', space=vmem, size = 0x10000, scoped, tag = 'input window, operand 1, single buffered']
    #allocation4 [shape = 's32[1]{0}', space=sflag, size = 0x4, scoped, tag = 'scoped memory for nw_kernel_regression.1']
    #allocation5 [shape = 'u8[65536]{0}', space=vmem, size = 0x10000, scoped, tag = 'input window, operand 2, single buffered']
    #allocation6 [shape = 's32[1]{0}', space=sflag, size = 0x4, scoped, tag = 'scoped memory for nw_kernel_regression.1']
    #allocation7 [shape = 'u8[65536]{0}', space=vmem, size = 0x10000, scoped, tag = 'input window, operand 3, single buffered']
    %10 = vsyncpa [#allocation4], 0
    %11 = vsyncpa [#allocation6], 0
    // Predicated region
    $region2: #{nw_kernel_regression.1} parent=1 // pred_check
      _
    $region3: #{nw_kernel_regression.1} parent=1 // pred_check_branch
      %13 = sbr.rel (0) target = $region5
    $region4: #{nw_kernel_regression.1} parent=1 // pred_region
      _
    $region5: #{nw_kernel_regression.1} parent=1 // pred_fallthru
      _
    // Predicated region
    $region6: #{nw_kernel_regression.1} parent=1 // pred_check
      _
    $region7: #{nw_kernel_regression.1} parent=1 // pred_check_branch
      %15 = sbr.rel (0) target = $region9
    $region8: #{nw_kernel_regression.1} parent=1 // pred_region
      %17 = vsyncadd [#allocation4], 1152
      %s18 = sshll.u32 %s1, 4
      %s19 = int_to_ptr.hbm [resolvable:$true] %s18
      %s20 = sshll.u32 [#allocation3], 4
      %s21 = int_to_ptr.vmem [resolvable:$true] %s20
      %26 = dma.hbm_to_vmem [thread:$0]  %s19, 896, %s21, [#allocation4], 128, 128, 8
    $region9: #{nw_kernel_regression.1} parent=1 // pred_fallthru
      _
    // Predicated region
    $region10: #{nw_kernel_regression.1} parent=1 // pred_check
      _
    $region11: #{nw_kernel_regression.1} parent=1 // pred_check_branch
      %28 = sbr.rel (0) target = $region13
    $region12: #{nw_kernel_regression.1} parent=1 // pred_region
      %30 = vsyncadd [#allocation6], 1152
      %s31 = sshll.u32 %s2, 4
      %s32 = int_to_ptr.hbm [resolvable:$true] %s31
      %s33 = sshll.u32 [#allocation5], 4
      %s34 = int_to_ptr.vmem [resolvable:$true] %s33
      %39 = dma.hbm_to_vmem [thread:$0]  %s32, 896, %s34, [#allocation6], 128, 128, 8
    $region13: #{nw_kernel_regression.1} parent=1 // pred_fallthru
      _
    // Predicated region
    $region14: #{nw_kernel_regression.1} parent=1 // pred_check
      _
    $region15: #{nw_kernel_regression.1} parent=1 // pred_check_branch
      %41 = sbr.rel (0) target = $region17
    $region16: #{nw_kernel_regression.1} parent=1 // pred_region
      %43 = vsyncadd [#allocation6], 1152
      %s44 = sshll.u32 %s3, 4
      %s45 = int_to_ptr.hbm [resolvable:$true] %s44
      %s46 = sshll.u32 [#allocation7], 4
      %s47 = int_to_ptr.vmem [resolvable:$true] %s46
      %52 = dma.hbm_to_vmem [thread:$0]  %s45, 896, %s47, [#allocation6], 128, 128, 8
    $region17: #{nw_kernel_regression.1} parent=1 // pred_fallthru
      _
    // Predicated region
    $region18: #{nw_kernel_regression.1} parent=1 // pred_check
      _
    $region19: #{nw_kernel_regression.1} parent=1 // pred_check_branch
      %54 = sbr.rel (0) target = $region21
    $region20: #{nw_kernel_regression.1} parent=1 // pred_region
      %56 = dma.done [#allocation4], 2048
    $region21: #{nw_kernel_regression.1} parent=1 // pred_fallthru
      _
    // Predicated region
    $region22: #{nw_kernel_regression.1} parent=1 // pred_check
      _
    $region23: #{nw_kernel_regression.1} parent=1 // pred_check_branch
      %58 = sbr.rel (0) target = $region25
    $region24: #{nw_kernel_regression.1} parent=1 // pred_region
      %60 = dma.done [#allocation6], 2048
    $region25: #{nw_kernel_regression.1} parent=1 // pred_fallthru
      _
    // Predicated region
    $region26: #{nw_kernel_regression.1} parent=1 // pred_check
      _
    $region27: #{nw_kernel_regression.1} parent=1 // pred_check_branch
      %62 = sbr.rel (0) target = $region29
    $region28: #{nw_kernel_regression.1} parent=1 // pred_region
      %64 = dma.done [#allocation6], 2048
    $region29: #{nw_kernel_regression.1} parent=1 // pred_fallthru
      _
    %s65 = sld [smem:[#allocation2]]
    %s66 = smul.f32 %s65, -0.5
    %s67 = smul.f32 %s66, %s65
    %v68 = vld [vmem:[#allocation3] sm:$0xff]
    %v69 = vld [vmem:[#allocation3 + $0x8] sm:$0xff]
    %v70 = vld [vmem:[#allocation3 + $0x10] sm:$0xff]
    %v71 = vld [vmem:[#allocation3 + $0x18] sm:$0xff]
    %v72 = vld [vmem:[#allocation3 + $0x20] sm:$0xff]
    %v73 = vld [vmem:[#allocation3 + $0x28] sm:$0xff]
    %v74 = vld [vmem:[#allocation3 + $0x30] sm:$0xff]
    %v75 = vld [vmem:[#allocation3 + $0x38] sm:$0xff]
    %v76 = vld [vmem:[#allocation3 + $0x40] sm:$0xff]
    %v77 = vld [vmem:[#allocation3 + $0x48] sm:$0xff]
    %v78 = vld [vmem:[#allocation3 + $0x50] sm:$0xff]
    %v79 = vld [vmem:[#allocation3 + $0x58] sm:$0xff]
    %v80 = vld [vmem:[#allocation3 + $0x60] sm:$0xff]
    %v81 = vld [vmem:[#allocation3 + $0x68] sm:$0xff]
    %v82 = vld [vmem:[#allocation3 + $0x70] sm:$0xff]
    %v83 = vld [vmem:[#allocation3 + $0x78] sm:$0xff]
    %v84 = vld [vmem:[#allocation5] sm:$0xff]
    %v85 = vld [vmem:[#allocation5 + $0x8] sm:$0xff]
    %v86 = vld [vmem:[#allocation5 + $0x10] sm:$0xff]
    %v87 = vld [vmem:[#allocation5 + $0x18] sm:$0xff]
    %v88 = vld [vmem:[#allocation5 + $0x20] sm:$0xff]
    %v89 = vld [vmem:[#allocation5 + $0x28] sm:$0xff]
    %v90 = vld [vmem:[#allocation5 + $0x30] sm:$0xff]
    %v91 = vld [vmem:[#allocation5 + $0x38] sm:$0xff]
    %v92 = vld [vmem:[#allocation5 + $0x40] sm:$0xff]
    %v93 = vld [vmem:[#allocation5 + $0x48] sm:$0xff]
    %v94 = vld [vmem:[#allocation5 + $0x50] sm:$0xff]
    %v95 = vld [vmem:[#allocation5 + $0x58] sm:$0xff]
    %v96 = vld [vmem:[#allocation5 + $0x60] sm:$0xff]
    %v97 = vld [vmem:[#allocation5 + $0x68] sm:$0xff]
    %v98 = vld [vmem:[#allocation5 + $0x70] sm:$0xff]
    %v99 = vld [vmem:[#allocation5 + $0x78] sm:$0xff]
    %v100 = vld [vmem:[#allocation7] sm:$0xff]
    %v101 = vld [vmem:[#allocation7 + $0x8] sm:$0xff]
    %v102 = vld [vmem:[#allocation7 + $0x10] sm:$0xff]
    %v103 = vld [vmem:[#allocation7 + $0x18] sm:$0xff]
    %v104 = vld [vmem:[#allocation7 + $0x20] sm:$0xff]
    %v105 = vld [vmem:[#allocation7 + $0x28] sm:$0xff]
    %v106 = vld [vmem:[#allocation7 + $0x30] sm:$0xff]
    %v107 = vld [vmem:[#allocation7 + $0x38] sm:$0xff]
    %v108 = vld [vmem:[#allocation7 + $0x40] sm:$0xff]
    %v109 = vld [vmem:[#allocation7 + $0x48] sm:$0xff]
    %v110 = vld [vmem:[#allocation7 + $0x50] sm:$0xff]
    %v111 = vld [vmem:[#allocation7 + $0x58] sm:$0xff]
    %v112 = vld [vmem:[#allocation7 + $0x60] sm:$0xff]
    %v113 = vld [vmem:[#allocation7 + $0x68] sm:$0xff]
    %v114 = vld [vmem:[#allocation7 + $0x70] sm:$0xff]
    %v115 = vld [vmem:[#allocation7 + $0x78] sm:$0xff]
    %v116 = vsub.f32 %v68, %v84
    %v117 = vsub.f32 %v69, %v85
    %v118 = vsub.f32 %v70, %v86
    %v119 = vsub.f32 %v71, %v87
    %v120 = vsub.f32 %v72, %v88
    %v121 = vsub.f32 %v73, %v89
    %v122 = vsub.f32 %v74, %v90
    %v123 = vsub.f32 %v75, %v91
    %v124 = vsub.f32 %v76, %v92
    %v125 = vsub.f32 %v77, %v93
    %v126 = vsub.f32 %v78, %v94
    %v127 = vsub.f32 %v79, %v95
    %v128 = vsub.f32 %v80, %v96
    %v129 = vsub.f32 %v81, %v97
    %v130 = vsub.f32 %v82, %v98
    %v131 = vsub.f32 %v83, %v99
    %v132 = vmul.f32 %v116, %v116
    %v133 = vmul.f32 %v117, %v117
    %v134 = vmul.f32 %v118, %v118
    %v135 = vmul.f32 %v119, %v119
    %v136 = vmul.f32 %v120, %v120
    %v137 = vmul.f32 %v121, %v121
    %v138 = vmul.f32 %v122, %v122
    %v139 = vmul.f32 %v123, %v123
    %v140 = vmul.f32 %v124, %v124
    %v141 = vmul.f32 %v125, %v125
    %v142 = vmul.f32 %v126, %v126
    %v143 = vmul.f32 %v127, %v127
    %v144 = vmul.f32 %v128, %v128
    %v145 = vmul.f32 %v129, %v129
    %v146 = vmul.f32 %v130, %v130
    %v147 = vmul.f32 %v131, %v131
    %v148 = vstv %s67
    %v149 = vmul.f32 %v148, %v132
    %v150 = vmul.f32 %v148, %v133
    %v151 = vmul.f32 %v148, %v134
    %v152 = vmul.f32 %v148, %v135
    %v153 = vmul.f32 %v148, %v136
    %v154 = vmul.f32 %v148, %v137
    %v155 = vmul.f32 %v148, %v138
    %v156 = vmul.f32 %v148, %v139
    %v157 = vmul.f32 %v148, %v140
    %v158 = vmul.f32 %v148, %v141
    %v159 = vmul.f32 %v148, %v142
    %v160 = vmul.f32 %v148, %v143
    %v161 = vmul.f32 %v148, %v144
    %v162 = vmul.f32 %v148, %v145
    %v163 = vmul.f32 %v148, %v146
    %v164 = vmul.f32 %v148, %v147
    %v165 = vmul.f32 %v149, 1.442695
    %v166 = vpow.pop %v165
    %v167 = vmul.f32 %v150, 1.442695
    %v168 = vpow.pop %v167
    %v169 = vmul.f32 %v151, 1.442695
    %v170 = vpow.pop %v169
    %v171 = vmul.f32 %v152, 1.442695
    %v172 = vpow.pop %v171
    %v173 = vmul.f32 %v153, 1.442695
    %v174 = vpow.pop %v173
    %v175 = vmul.f32 %v154, 1.442695
    %v176 = vpow.pop %v175
    %v177 = vmul.f32 %v155, 1.442695
    %v178 = vpow.pop %v177
    %v179 = vmul.f32 %v156, 1.442695
    %v180 = vpow.pop %v179
    %v181 = vmul.f32 %v157, 1.442695
    %v182 = vpow.pop %v181
    %v183 = vmul.f32 %v158, 1.442695
    %v184 = vpow.pop %v183
    %v185 = vmul.f32 %v159, 1.442695
    %v186 = vpow.pop %v185
    %v187 = vmul.f32 %v160, 1.442695
    %v188 = vpow.pop %v187
    %v189 = vmul.f32 %v161, 1.442695
    %v190 = vpow.pop %v189
    %v191 = vmul.f32 %v162, 1.442695
    %v192 = vpow.pop %v191
    %v193 = vmul.f32 %v163, 1.442695
    %v194 = vpow.pop %v193
    %v195 = vmul.f32 %v164, 1.442695
    %v196 = vpow.pop %v195
    %v197 = vmul.f32 %v166, %v100
    %v198 = vmul.f32 %v168, %v101
    %v199 = vmul.f32 %v170, %v102
    %v200 = vmul.f32 %v172, %v103
    %v201 = vmul.f32 %v174, %v104
    %v202 = vmul.f32 %v176, %v105
    %v203 = vmul.f32 %v178, %v106
    %v204 = vmul.f32 %v180, %v107
    %v205 = vmul.f32 %v182, %v108
    %v206 = vmul.f32 %v184, %v109
    %v207 = vmul.f32 %v186, %v110
    %v208 = vmul.f32 %v188, %v111
    %v209 = vmul.f32 %v190, %v112
    %v210 = vmul.f32 %v192, %v113
    %v211 = vmul.f32 %v194, %v114
    %v212 = vmul.f32 %v196, %v115
    %vm213 = vcmask 400384
    %v214 = vsel %vm213, %v197, 0.0
    %215 = vadd.xlane.f32.xlu0 %v214
    %v216 = vpop.xlane.xlu0 %215
    %v217 = vsel %vm213, %v198, 0.0
    %218 = vadd.xlane.f32.xlu0 %v217
    %v219 = vpop.xlane.xlu0 %218
    %v220 = vsel %vm213, %v199, 0.0
    %221 = vadd.xlane.f32.xlu0 %v220
    %v222 = vpop.xlane.xlu0 %221
    %v223 = vsel %vm213, %v200, 0.0
    %224 = vadd.xlane.f32.xlu0 %v223
    %v225 = vpop.xlane.xlu0 %224
    %v226 = vsel %vm213, %v201, 0.0
    %227 = vadd.xlane.f32.xlu0 %v226
    %v228 = vpop.xlane.xlu0 %227
    %v229 = vsel %vm213, %v202, 0.0
    %230 = vadd.xlane.f32.xlu0 %v229
    %v231 = vpop.xlane.xlu0 %230
    %v232 = vsel %vm213, %v203, 0.0
    %233 = vadd.xlane.f32.xlu0 %v232
    %v234 = vpop.xlane.xlu0 %233
    %v235 = vsel %vm213, %v204, 0.0
    %236 = vadd.xlane.f32.xlu0 %v235
    %v237 = vpop.xlane.xlu0 %236
    %v238 = vsel %vm213, %v205, 0.0
    %239 = vadd.xlane.f32.xlu0 %v238
    %v240 = vpop.xlane.xlu0 %239
    %v241 = vsel %vm213, %v206, 0.0
    %242 = vadd.xlane.f32.xlu0 %v241
    %v243 = vpop.xlane.xlu0 %242
    %v244 = vsel %vm213, %v207, 0.0
    %245 = vadd.xlane.f32.xlu0 %v244
    %v246 = vpop.xlane.xlu0 %245
    %v247 = vsel %vm213, %v208, 0.0
    %248 = vadd.xlane.f32.xlu0 %v247
    %v249 = vpop.xlane.xlu0 %248
    %v250 = vsel %vm213, %v209, 0.0
    %251 = vadd.xlane.f32.xlu0 %v250
    %v252 = vpop.xlane.xlu0 %251
    %v253 = vsel %vm213, %v210, 0.0
    %254 = vadd.xlane.f32.xlu0 %v253
    %v255 = vpop.xlane.xlu0 %254
    %v256 = vsel %vm213, %v211, 0.0
    %257 = vadd.xlane.f32.xlu0 %v256
    %v258 = vpop.xlane.xlu0 %257
    %v259 = vsel %vm213, %v212, 0.0
    %260 = vadd.xlane.f32.xlu0 %v259
    %v261 = vpop.xlane.xlu0 %260
    %v262 = vsel %vm213, %v166, 0.0
    %263 = vadd.xlane.f32.xlu0 %v262
    %v264 = vpop.xlane.xlu0 %263
    %v265 = vsel %vm213, %v168, 0.0
    %266 = vadd.xlane.f32.xlu0 %v265
    %v267 = vpop.xlane.xlu0 %266
    %v268 = vsel %vm213, %v170, 0.0
    %269 = vadd.xlane.f32.xlu0 %v268
    %v270 = vpop.xlane.xlu0 %269
    %v271 = vsel %vm213, %v172, 0.0
    %272 = vadd.xlane.f32.xlu0 %v271
    %v273 = vpop.xlane.xlu0 %272
    %v274 = vsel %vm213, %v174, 0.0
    %275 = vadd.xlane.f32.xlu0 %v274
    %v276 = vpop.xlane.xlu0 %275
    %v277 = vsel %vm213, %v176, 0.0
    %278 = vadd.xlane.f32.xlu0 %v277
    %v279 = vpop.xlane.xlu0 %278
    %v280 = vsel %vm213, %v178, 0.0
    %281 = vadd.xlane.f32.xlu0 %v280
    %v282 = vpop.xlane.xlu0 %281
    %v283 = vsel %vm213, %v180, 0.0
    %284 = vadd.xlane.f32.xlu0 %v283
    %v285 = vpop.xlane.xlu0 %284
    %v286 = vsel %vm213, %v182, 0.0
    %287 = vadd.xlane.f32.xlu0 %v286
    %v288 = vpop.xlane.xlu0 %287
    %v289 = vsel %vm213, %v184, 0.0
    %290 = vadd.xlane.f32.xlu0 %v289
    %v291 = vpop.xlane.xlu0 %290
    %v292 = vsel %vm213, %v186, 0.0
    %293 = vadd.xlane.f32.xlu0 %v292
    %v294 = vpop.xlane.xlu0 %293
    %v295 = vsel %vm213, %v188, 0.0
    %296 = vadd.xlane.f32.xlu0 %v295
    %v297 = vpop.xlane.xlu0 %296
    %v298 = vsel %vm213, %v190, 0.0
    %299 = vadd.xlane.f32.xlu0 %v298
    %v300 = vpop.xlane.xlu0 %299
    %v301 = vsel %vm213, %v192, 0.0
    %302 = vadd.xlane.f32.xlu0 %v301
    %v303 = vpop.xlane.xlu0 %302
    %v304 = vsel %vm213, %v194, 0.0
    %305 = vadd.xlane.f32.xlu0 %v304
    %v306 = vpop.xlane.xlu0 %305
    %v307 = vsel %vm213, %v196, 0.0
    %308 = vadd.xlane.f32.xlu0 %v307
    %v309 = vpop.xlane.xlu0 %308
    %v310 = vmax.f32 %v264, 1e-30
    %v311 = vmax.f32 %v267, 1e-30
    %v312 = vmax.f32 %v270, 1e-30
    %v313 = vmax.f32 %v273, 1e-30
    %v314 = vmax.f32 %v276, 1e-30
    %v315 = vmax.f32 %v279, 1e-30
    %v316 = vmax.f32 %v282, 1e-30
    %v317 = vmax.f32 %v285, 1e-30
    %v318 = vmax.f32 %v288, 1e-30
    %v319 = vmax.f32 %v291, 1e-30
    %v320 = vmax.f32 %v294, 1e-30
    %v321 = vmax.f32 %v297, 1e-30
    %v322 = vmax.f32 %v300, 1e-30
    %v323 = vmax.f32 %v303, 1e-30
    %v324 = vmax.f32 %v306, 1e-30
    %v325 = vmax.f32 %v309, 1e-30
    %v326 = vrcp.pop %v310
    %v327 = vmul.f32 %v310, %v326
    %v328 = vsub.f32 1.0, %v327
    %v329 = vmul.f32 %v326, %v328
    %v330 = vadd.f32 %v326, %v329
    %vm331 = vweird.f32 %v310
    %vm332 = vweird.f32 %v326
    %vm333 = vmor %vm331, %vm332
    %v334 = vsel %vm333, %v326, %v330
    %v335 = vand.u32 2147483647, %v310
    %vm336 = vcmp.eq.f32.partialorder %v335, 8.507059e+37
    %v337 = vand.u32 %v310, 2147483648
    %v338 = vor.u32 1.1754944e-38, %v337
    %v339 = vsel %vm336, %v338, %v334
    %v340 = vmul.f32 %v216, %v339
    %v341 = vrcp.pop %v311
    %v342 = vmul.f32 %v311, %v341
    %v343 = vsub.f32 1.0, %v342
    %v344 = vmul.f32 %v341, %v343
    %v345 = vadd.f32 %v341, %v344
    %vm346 = vweird.f32 %v311
    %vm347 = vweird.f32 %v341
    %vm348 = vmor %vm346, %vm347
    %v349 = vsel %vm348, %v341, %v345
    %v350 = vand.u32 2147483647, %v311
    %vm351 = vcmp.eq.f32.partialorder %v350, 8.507059e+37
    %v352 = vand.u32 %v311, 2147483648
    %v353 = vor.u32 1.1754944e-38, %v352
    %v354 = vsel %vm351, %v353, %v349
    %v355 = vmul.f32 %v219, %v354
    %v356 = vrcp.pop %v312
    %v357 = vmul.f32 %v312, %v356
    %v358 = vsub.f32 1.0, %v357
    %v359 = vmul.f32 %v356, %v358
    %v360 = vadd.f32 %v356, %v359
    %vm361 = vweird.f32 %v312
    %vm362 = vweird.f32 %v356
    %vm363 = vmor %vm361, %vm362
    %v364 = vsel %vm363, %v356, %v360
    %v365 = vand.u32 2147483647, %v312
    %vm366 = vcmp.eq.f32.partialorder %v365, 8.507059e+37
    %v367 = vand.u32 %v312, 2147483648
    %v368 = vor.u32 1.1754944e-38, %v367
    %v369 = vsel %vm366, %v368, %v364
    %v370 = vmul.f32 %v222, %v369
    %v371 = vrcp.pop %v313
    %v372 = vmul.f32 %v313, %v371
    %v373 = vsub.f32 1.0, %v372
    %v374 = vmul.f32 %v371, %v373
    %v375 = vadd.f32 %v371, %v374
    %vm376 = vweird.f32 %v313
    %vm377 = vweird.f32 %v371
    %vm378 = vmor %vm376, %vm377
    %v379 = vsel %vm378, %v371, %v375
    %v380 = vand.u32 2147483647, %v313
    %vm381 = vcmp.eq.f32.partialorder %v380, 8.507059e+37
    %v382 = vand.u32 %v313, 2147483648
    %v383 = vor.u32 1.1754944e-38, %v382
    %v384 = vsel %vm381, %v383, %v379
    %v385 = vmul.f32 %v225, %v384
    %v386 = vrcp.pop %v314
    %v387 = vmul.f32 %v314, %v386
    %v388 = vsub.f32 1.0, %v387
    %v389 = vmul.f32 %v386, %v388
    %v390 = vadd.f32 %v386, %v389
    %vm391 = vweird.f32 %v314
    %vm392 = vweird.f32 %v386
    %vm393 = vmor %vm391, %vm392
    %v394 = vsel %vm393, %v386, %v390
    %v395 = vand.u32 2147483647, %v314
    %vm396 = vcmp.eq.f32.partialorder %v395, 8.507059e+37
    %v397 = vand.u32 %v314, 2147483648
    %v398 = vor.u32 1.1754944e-38, %v397
    %v399 = vsel %vm396, %v398, %v394
    %v400 = vmul.f32 %v228, %v399
    %v401 = vrcp.pop %v315
    %v402 = vmul.f32 %v315, %v401
    %v403 = vsub.f32 1.0, %v402
    %v404 = vmul.f32 %v401, %v403
    %v405 = vadd.f32 %v401, %v404
    %vm406 = vweird.f32 %v315
    %vm407 = vweird.f32 %v401
    %vm408 = vmor %vm406, %vm407
    %v409 = vsel %vm408, %v401, %v405
    %v410 = vand.u32 2147483647, %v315
    %vm411 = vcmp.eq.f32.partialorder %v410, 8.507059e+37
    %v412 = vand.u32 %v315, 2147483648
    %v413 = vor.u32 1.1754944e-38, %v412
    %v414 = vsel %vm411, %v413, %v409
    %v415 = vmul.f32 %v231, %v414
    %v416 = vrcp.pop %v316
    %v417 = vmul.f32 %v316, %v416
    %v418 = vsub.f32 1.0, %v417
    %v419 = vmul.f32 %v416, %v418
    %v420 = vadd.f32 %v416, %v419
    %vm421 = vweird.f32 %v316
    %vm422 = vweird.f32 %v416
    %vm423 = vmor %vm421, %vm422
    %v424 = vsel %vm423, %v416, %v420
    %v425 = vand.u32 2147483647, %v316
    %vm426 = vcmp.eq.f32.partialorder %v425, 8.507059e+37
    %v427 = vand.u32 %v316, 2147483648
    %v428 = vor.u32 1.1754944e-38, %v427
    %v429 = vsel %vm426, %v428, %v424
    %v430 = vmul.f32 %v234, %v429
    %v431 = vrcp.pop %v317
    %v432 = vmul.f32 %v317, %v431
    %v433 = vsub.f32 1.0, %v432
    %v434 = vmul.f32 %v431, %v433
    %v435 = vadd.f32 %v431, %v434
    %vm436 = vweird.f32 %v317
    %vm437 = vweird.f32 %v431
    %vm438 = vmor %vm436, %vm437
    %v439 = vsel %vm438, %v431, %v435
    %v440 = vand.u32 2147483647, %v317
    %vm441 = vcmp.eq.f32.partialorder %v440, 8.507059e+37
    %v442 = vand.u32 %v317, 2147483648
    %v443 = vor.u32 1.1754944e-38, %v442
    %v444 = vsel %vm441, %v443, %v439
    %v445 = vmul.f32 %v237, %v444
    %v446 = vrcp.pop %v318
    %v447 = vmul.f32 %v318, %v446
    %v448 = vsub.f32 1.0, %v447
    %v449 = vmul.f32 %v446, %v448
    %v450 = vadd.f32 %v446, %v449
    %vm451 = vweird.f32 %v318
    %vm452 = vweird.f32 %v446
    %vm453 = vmor %vm451, %vm452
    %v454 = vsel %vm453, %v446, %v450
    %v455 = vand.u32 2147483647, %v318
    %vm456 = vcmp.eq.f32.partialorder %v455, 8.507059e+37
    %v457 = vand.u32 %v318, 2147483648
    %v458 = vor.u32 1.1754944e-38, %v457
    %v459 = vsel %vm456, %v458, %v454
    %v460 = vmul.f32 %v240, %v459
    %v461 = vrcp.pop %v319
    %v462 = vmul.f32 %v319, %v461
    %v463 = vsub.f32 1.0, %v462
    %v464 = vmul.f32 %v461, %v463
    %v465 = vadd.f32 %v461, %v464
    %vm466 = vweird.f32 %v319
    %vm467 = vweird.f32 %v461
    %vm468 = vmor %vm466, %vm467
    %v469 = vsel %vm468, %v461, %v465
    %v470 = vand.u32 2147483647, %v319
    %vm471 = vcmp.eq.f32.partialorder %v470, 8.507059e+37
    %v472 = vand.u32 %v319, 2147483648
    %v473 = vor.u32 1.1754944e-38, %v472
    %v474 = vsel %vm471, %v473, %v469
    %v475 = vmul.f32 %v243, %v474
    %v476 = vrcp.pop %v320
    %v477 = vmul.f32 %v320, %v476
    %v478 = vsub.f32 1.0, %v477
    %v479 = vmul.f32 %v476, %v478
    %v480 = vadd.f32 %v476, %v479
    %vm481 = vweird.f32 %v320
    %vm482 = vweird.f32 %v476
    %vm483 = vmor %vm481, %vm482
    %v484 = vsel %vm483, %v476, %v480
    %v485 = vand.u32 2147483647, %v320
    %vm486 = vcmp.eq.f32.partialorder %v485, 8.507059e+37
    %v487 = vand.u32 %v320, 2147483648
    %v488 = vor.u32 1.1754944e-38, %v487
    %v489 = vsel %vm486, %v488, %v484
    %v490 = vmul.f32 %v246, %v489
    %v491 = vrcp.pop %v321
    %v492 = vmul.f32 %v321, %v491
    %v493 = vsub.f32 1.0, %v492
    %v494 = vmul.f32 %v491, %v493
    %v495 = vadd.f32 %v491, %v494
    %vm496 = vweird.f32 %v321
    %vm497 = vweird.f32 %v491
    %vm498 = vmor %vm496, %vm497
    %v499 = vsel %vm498, %v491, %v495
    %v500 = vand.u32 2147483647, %v321
    %vm501 = vcmp.eq.f32.partialorder %v500, 8.507059e+37
    %v502 = vand.u32 %v321, 2147483648
    %v503 = vor.u32 1.1754944e-38, %v502
    %v504 = vsel %vm501, %v503, %v499
    %v505 = vmul.f32 %v249, %v504
    %v506 = vrcp.pop %v322
    %v507 = vmul.f32 %v322, %v506
    %v508 = vsub.f32 1.0, %v507
    %v509 = vmul.f32 %v506, %v508
    %v510 = vadd.f32 %v506, %v509
    %vm511 = vweird.f32 %v322
    %vm512 = vweird.f32 %v506
    %vm513 = vmor %vm511, %vm512
    %v514 = vsel %vm513, %v506, %v510
    %v515 = vand.u32 2147483647, %v322
    %vm516 = vcmp.eq.f32.partialorder %v515, 8.507059e+37
    %v517 = vand.u32 %v322, 2147483648
    %v518 = vor.u32 1.1754944e-38, %v517
    %v519 = vsel %vm516, %v518, %v514
    %v520 = vmul.f32 %v252, %v519
    %v521 = vrcp.pop %v323
    %v522 = vmul.f32 %v323, %v521
    %v523 = vsub.f32 1.0, %v522
    %v524 = vmul.f32 %v521, %v523
    %v525 = vadd.f32 %v521, %v524
    %vm526 = vweird.f32 %v323
    %vm527 = vweird.f32 %v521
    %vm528 = vmor %vm526, %vm527
    %v529 = vsel %vm528, %v521, %v525
    %v530 = vand.u32 2147483647, %v323
    %vm531 = vcmp.eq.f32.partialorder %v530, 8.507059e+37
    %v532 = vand.u32 %v323, 2147483648
    %v533 = vor.u32 1.1754944e-38, %v532
    %v534 = vsel %vm531, %v533, %v529
    %v535 = vmul.f32 %v255, %v534
    %v536 = vrcp.pop %v324
    %v537 = vmul.f32 %v324, %v536
    %v538 = vsub.f32 1.0, %v537
    %v539 = vmul.f32 %v536, %v538
    %v540 = vadd.f32 %v536, %v539
    %vm541 = vweird.f32 %v324
    %vm542 = vweird.f32 %v536
    %vm543 = vmor %vm541, %vm542
    %v544 = vsel %vm543, %v536, %v540
    %v545 = vand.u32 2147483647, %v324
    %vm546 = vcmp.eq.f32.partialorder %v545, 8.507059e+37
    %v547 = vand.u32 %v324, 2147483648
    %v548 = vor.u32 1.1754944e-38, %v547
    %v549 = vsel %vm546, %v548, %v544
    %v550 = vmul.f32 %v258, %v549
    %v551 = vrcp.pop %v325
    %v552 = vmul.f32 %v325, %v551
    %v553 = vsub.f32 1.0, %v552
    %v554 = vmul.f32 %v551, %v553
    %v555 = vadd.f32 %v551, %v554
    %vm556 = vweird.f32 %v325
    %vm557 = vweird.f32 %v551
    %vm558 = vmor %vm556, %vm557
    %v559 = vsel %vm558, %v551, %v555
    %v560 = vand.u32 2147483647, %v325
    %vm561 = vcmp.eq.f32.partialorder %v560, 8.507059e+37
    %v562 = vand.u32 %v325, 2147483648
    %v563 = vor.u32 1.1754944e-38, %v562
    %v564 = vsel %vm561, %v563, %v559
    %v565 = vmul.f32 %v261, %v564
    %v582 = vlaneseq
    %v583 = vand.u32 %v582, 127
    %v584 = vperm.slane %v340, %v583
    %v585 = vadd.s32 %v583, 4294967288
    %v586 = vperm.slane %v355, %v585
    %vm587 = vcmask 130112
    %v588 = vsel %vm587, %v586, %v584
    %v589 = vadd.s32 %v583, 4294967280
    %v590 = vperm.slane %v370, %v589
    %vm591 = vcmask 195712
    %v592 = vsel %vm591, %v590, %v588
    %v593 = vadd.s32 %v583, 4294967272
    %v594 = vperm.slane %v385, %v593
    %vm595 = vcmask 261312
    %v596 = vsel %vm595, %v594, %v592
    %v597 = vadd.s32 %v583, 4294967264
    %v598 = vperm.slane %v400, %v597
    %vm599 = vcmask 326912
    %v600 = vsel %vm599, %v598, %v596
    %v601 = vadd.s32 %v583, 4294967256
    %v602 = vperm.slane %v415, %v601
    %vm603 = vcmask 392512
    %v604 = vsel %vm603, %v602, %v600
    %v605 = vadd.s32 %v583, 4294967248
    %v606 = vperm.slane %v430, %v605
    %vm607 = vcmask 458112
    %v608 = vsel %vm607, %v606, %v604
    %v609 = vadd.s32 %v583, 4294967240
    %v610 = vperm.slane %v445, %v609
    %vm611 = vcmask 523712
    %v612 = vsel %vm611, %v610, %v608
    %v613 = vadd.s32 %v583, 4294967232
    %v614 = vperm.slane %v460, %v613
    %vm615 = vcmask 589312
    %v616 = vsel %vm615, %v614, %v612
    %v617 = vadd.s32 %v583, 4294967224
    %v618 = vperm.slane %v475, %v617
    %vm619 = vcmask 654912
    %v620 = vsel %vm619, %v618, %v616
    %v621 = vadd.s32 %v583, 4294967216
    %v622 = vperm.slane %v490, %v621
    %vm623 = vcmask 720512
    %v624 = vsel %vm623, %v622, %v620
    %v625 = vadd.s32 %v583, 4294967208
    %v626 = vperm.slane %v505, %v625
    %vm627 = vcmask 786112
    %v628 = vsel %vm627, %v626, %v624
    %v629 = vadd.s32 %v583, 4294967200
    %v630 = vperm.slane %v520, %v629
    %vm631 = vcmask 851712
    %v632 = vsel %vm631, %v630, %v628
    %v633 = vadd.s32 %v583, 4294967192
    %v634 = vperm.slane %v535, %v633
    %vm635 = vcmask 917312
    %v636 = vsel %vm635, %v634, %v632
    %v637 = vadd.s32 %v583, 4294967184
    %v638 = vperm.slane %v550, %v637
    %vm639 = vcmask 982912
    %v640 = vsel %vm639, %v638, %v636
    %v641 = vadd.s32 %v583, 4294967176
    %v642 = vperm.slane %v565, %v641
    %vm643 = vcmask 1048512
    %v644 = vsel %vm643, %v642, %v640
    %646 = vst [vmem:[%s4] sm:$0x1] %v644
    // Predicated region
    $region30: #{nw_kernel_regression.1} parent=1 // pred_check
      _
    $region31: #{nw_kernel_regression.1} parent=1 // pred_check_branch
      %648 = sbr.rel (0) target = $region33
    $region32: #{nw_kernel_regression.1} parent=1 // pred_region
      _
    $region33: #{nw_kernel_regression.1} parent=1 // pred_fallthru
      _
    // Predicated region
    $region34: #{nw_kernel_regression.1} parent=1 // pred_check
      _
    $region35: #{nw_kernel_regression.1} parent=1 // pred_check_branch
      %650 = sbr.rel (0) target = $region37
    $region36: #{nw_kernel_regression.1} parent=1 // pred_region
      _
    $region37: #{nw_kernel_regression.1} parent=1 // pred_fallthru
      _
    %651 = vsyncpa [#allocation4], 1
    %652 = vsyncpa [#allocation6], 1

</llo_original>
